<compile_context>
chip_gen: v5e
topology: v5e:2x2
jax: 0.10.0
libtpu: 0.0.40
codegen_flags: <defaults>
</compile_context>

<pallas_src>
import math
import jax
import jax.numpy as jnp
from jax.experimental import pallas as pl
from jax.experimental.pallas import tpu as pltpu


def _round_up(x, m):
    return (x + m - 1) // m * m


# --------------------- Pallas matmul (+ bias + activation), full-K tiles ---------------------

def _make_matmul_kernel(activation):
    def kernel(a_ref, b_ref, bias_ref, o_ref):
        y = jnp.dot(a_ref[...], b_ref[...], preferred_element_type=jnp.float32)
        y = y + bias_ref[...]
        if activation == "relu":
            y = jnp.maximum(y, 0.0)
        elif activation == "tanh":
            y = jnp.tanh(y)
        o_ref[...] = y.astype(o_ref.dtype)
    return kernel


def matmul_bias_act(a, b, bias, activation):
    """out = act(a @ b + bias).  a: (M, K) bf16, b: (K, N) bf16, bias: (N,) f32."""
    M, K = a.shape
    K2, N = b.shape
    assert K == K2

    # Adaptive M tile: small layers are a single near-exact tile; large layers
    # use 512-row tiles (>= 2 parallel grid steps so v7x's 2 TCs both work).
    tm = _round_up(M, 16) if M <= 1024 else 512
    M_pad = _round_up(M, tm)
    N_pad = _round_up(N, 128)          # lane-dense output stores

    if M_pad != M:
        a = jnp.pad(a, ((0, M_pad - M), (0, 0)))
    if N_pad != N:
        b = jnp.pad(b, ((0, 0), (0, N_pad - N)))
        bias = jnp.pad(bias, ((0, N_pad - N),))
    bias = bias.reshape(1, N_pad).astype(jnp.float32)

    out = pl.pallas_call(
        _make_matmul_kernel(activation),
        out_shape=jax.ShapeDtypeStruct((M_pad, N_pad), jnp.float32),
        grid_spec=pltpu.PrefetchScalarGridSpec(
            num_scalar_prefetch=0,
            grid=(M_pad // tm,),
            in_specs=[
                pl.BlockSpec((tm, K), lambda i: (i, 0)),        # full-K A tile
                pl.BlockSpec((K, N_pad), lambda i: (0, 0)),     # weights resident
                pl.BlockSpec((1, N_pad), lambda i: (0, 0)),     # bias resident
            ],
            out_specs=pl.BlockSpec((tm, N_pad), lambda i: (i, 0)),
        ),
        compiler_params=pltpu.CompilerParams(
            dimension_semantics=("parallel",)),
    )(a, b, bias)
    return out[:M, :N]


# --------------------- Pallas 2x2 max-pool (stride 2, floor mode) ---------------------

def _maxpool_kernel(a_ref, b_ref, c_ref, d_ref, o_ref):
    o_ref[...] = jnp.maximum(jnp.maximum(a_ref[...], b_ref[...]),
                             jnp.maximum(c_ref[...], d_ref[...]))


def maxpool_2x2(x):
    """nn.MaxPool2d(2, stride=2) semantics, x: (N, H, W, C) float32."""
    N, H, W, C = x.shape
    OH, OW = H // 2, W // 2
    x = x[:, :2 * OH, :2 * OW, :]
    R, L = N * OH, OW * C          # L is a multiple of 128 for every layer here
    wins = [x[:, a::2, b::2, :].reshape(R, L) for a in (0, 1) for b in (0, 1)]
    spec = pl.BlockSpec((R, L), lambda i: (0, 0))
    out = pl.pallas_call(
        _maxpool_kernel,
        out_shape=jax.ShapeDtypeStruct((R, L), x.dtype),
        grid_spec=pltpu.PrefetchScalarGridSpec(
            num_scalar_prefetch=0,
            grid=(1,),
            in_specs=[spec, spec, spec, spec],
            out_specs=spec,
        ),
        compiler_params=pltpu.CompilerParams(dimension_semantics=("arbitrary",)),
    )(*wins)
    return out.reshape(N, OH, OW, C)


# --------------------- conv / conv-transpose wrappers (JAX glue) ---------------------

def _im2col(x, kh, kw, stride):
    # x: (N, H, W, C) -> patches (N*OH*OW, kh*kw*C), row layout (kh, kw, C)
    N, H, W, C = x.shape
    OH = (H - kh) // stride + 1
    OW = (W - kw) // stride + 1
    cols = []
    for i in range(kh):
        for j in range(kw):
            cols.append(x[:, i:i + stride * (OH - 1) + 1:stride,
                          j:j + stride * (OW - 1) + 1:stride, :])
    p = jnp.stack(cols, axis=3)  # (N, OH, OW, kh*kw, C)
    return p.reshape(N * OH * OW, kh * kw * C), OH, OW


def conv2d(x, w, b, stride, padding, activation):
    # x: NHWC; w: PyTorch layout (Cout, Cin, KH, KW)
    Cout, Cin, KH, KW = w.shape
    xb = x.astype(jnp.bfloat16)
    if padding:
        xb = jnp.pad(xb, ((0, 0), (padding, padding), (padding, padding), (0, 0)))
    patches, OH, OW = _im2col(xb, KH, KW, stride)
    wmat = jnp.transpose(w, (2, 3, 1, 0)).reshape(KH * KW * Cin, Cout)
    out = matmul_bias_act(patches, wmat.astype(jnp.bfloat16), b, activation)
    return out.reshape(x.shape[0], OH, OW, Cout)


def conv_transpose2d(x, w, b, stride, padding, activation):
    """PyTorch ConvTranspose2d via sub-pixel (stride-phase) decomposition.

    x: (N, H, W, Cin) NHWC; w: PyTorch layout (Cin, Cout, KH, KW).
    Requires KH % stride == KW % stride == 0 (true for every layer of this model).
    """
    Cin, Cout, KH, KW = w.shape
    N, H, W, C = x.shape
    s = stride
    assert C == Cin and KH % s == 0 and KW % s == 0
    Th, Tw = KH // s, KW // s   # taps per phase (per spatial axis)

    # Phase-decomposed correlation weights:
    #   w_sub[u_h, u_w, ic, r_h, r_w, oc] = w[ic, oc, (Th-1-u_h)*s + r_h, (Tw-1-u_w)*s + r_w]
    wr = w.reshape(Cin, Cout, Th, s, Tw, s)                # [ic, oc, t_h, r_h, t_w, r_w]
    wr = jnp.flip(wr, axis=(2, 4))                         # reverse taps (correlation form)
    wmat = jnp.transpose(wr, (2, 4, 0, 3, 5, 1)).reshape(Th * Tw * Cin, s * s * Cout)
    bias_full = jnp.tile(b, s * s)                         # column order = (r_h, r_w, oc)

    # The output-side `padding` crop removes whole stride-blocks of output rows;
    # drop those up front on the input, keep only the sub-stride residual for the end.
    cb_h = cb_w = padding // s
    res_h = res_w = padding - cb_h * s
    dh, dw = (Th - 1) - cb_h, (Tw - 1) - cb_w              # net per-axis pad (>0) / crop (<0)

    xb = x.astype(jnp.bfloat16)
    ph, pw = max(dh, 0), max(dw, 0)
    if ph or pw:
        xb = jnp.pad(xb, ((0, 0), (ph, ph), (pw, pw), (0, 0)))
    ch, cw = max(-dh, 0), max(-dw, 0)
    if ch or cw:
        xb = xb[:, ch:xb.shape[1] - ch, cw:xb.shape[2] - cw, :]

    patches, Qh, Qw = _im2col(xb, Th, Tw, 1)               # stride-1, un-dilated input
    out = matmul_bias_act(patches, wmat.astype(jnp.bfloat16), bias_full, activation)

    # depth-to-space interleave of the stride^2 phases, then residual crop
    out = out.reshape(N, Qh, Qw, s, s, Cout)
    out = jnp.transpose(out, (0, 1, 3, 2, 4, 5)).reshape(N, Qh * s, Qw * s, Cout)
    if res_h or res_w:
        out = out[:, res_h:Qh * s - res_h, res_w:Qw * s - res_w, :]
    return out


# --------------------- deterministic parameter init ---------------------

def _init_conv(key, cout, cin, k):
    bound = 1.0 / math.sqrt(cin * k * k)
    k1, k2 = jax.random.split(key)
    w = jax.random.uniform(k1, (cout, cin, k, k), jnp.float32, -bound, bound)
    b = jax.random.uniform(k2, (cout,), jnp.float32, -bound, bound)
    return w, b


def _init_convT(key, cin, cout, k):
    bound = 1.0 / math.sqrt(cout * k * k)
    k1, k2 = jax.random.split(key)
    w = jax.random.uniform(k1, (cin, cout, k, k), jnp.float32, -bound, bound)
    b = jax.random.uniform(k2, (cout,), jnp.float32, -bound, bound)
    return w, b


def init_params(key):
    ks = jax.random.split(key, 7)
    return {
        "enc1": _init_conv(ks[0], 32, 1, 4),     # Conv2d(1, 32, 4, s2, p1)
        "enc2": _init_conv(ks[1], 64, 32, 2),    # Conv2d(32, 64, 2, s2, p1)
        "enc3": _init_conv(ks[2], 128, 64, 3),   # Conv2d(64, 128, 3, s2, p1)
        "dec1": _init_convT(ks[3], 128, 64, 4),  # ConvT(128, 64, 4, s2)
        "dec2": _init_convT(ks[4], 64, 32, 4),   # ConvT(64, 32, 4, s2)
        "dec3": _init_convT(ks[5], 32, 16, 8),   # ConvT(32, 16, 8, s4)
        "dec4": _init_convT(ks[6], 16, 1, 4),    # ConvT(16, 1, 4, s4, p52)
    }


# --------------------- forward ---------------------

def scatter_autoencoder_forward(params, x_nchw):
    x = jnp.transpose(x_nchw, (0, 2, 3, 1))  # NCHW -> NHWC
    # encoder
    x = conv2d(x, *params["enc1"], stride=2, padding=1, activation="relu")
    x = maxpool_2x2(x)
    x = conv2d(x, *params["enc2"], stride=2, padding=1, activation="relu")
    x = maxpool_2x2(x)
    x = conv2d(x, *params["enc3"], stride=2, padding=1, activation="relu")
    x = maxpool_2x2(x)
    # decoder
    x = conv_transpose2d(x, *params["dec1"], stride=2, padding=0, activation="relu")
    x = conv_transpose2d(x, *params["dec2"], stride=2, padding=0, activation="relu")
    x = conv_transpose2d(x, *params["dec3"], stride=4, padding=0, activation="relu")
    x = conv_transpose2d(x, *params["dec4"], stride=4, padding=52, activation="tanh")
    return jnp.transpose(x, (0, 3, 1, 2))  # NHWC -> NCHW


if __name__ == "__main__":
    key = jax.random.PRNGKey(0)
    kx, kp = jax.random.split(key)
    # smallest input for which every encoder stage stays non-degenerate
    x = jax.random.normal(kx, (2, 1, 64, 64), jnp.float32)  # NCHW like PyTorch
    params = init_params(kp)

    fwd = jax.jit(scatter_autoencoder_forward)
    y = jax.block_until_ready(fwd(params, x))

    # PyTorch shape trace for a 64x64 input ends at (2, 1, 72, 72)
    assert y.shape == (2, 1, 72, 72), y.shape
    assert bool(jnp.all(jnp.isfinite(y)))
    assert bool(jnp.all(jnp.abs(y) <= 1.0))  # final Tanh
    print("KERNEL_OK")
</pallas_src>

<mosaic_0001>
module attributes {stable_mosaic.version = 11 : i64} {
  func.func @kernel(%arg0: i32, %arg1: memref<512x16xbf16, #tpu.memory_space<vmem>>, %arg2: memref<16x128xbf16, #tpu.memory_space<vmem>>, %arg3: memref<1x128xf32, #tpu.memory_space<vmem>>, %arg4: memref<512x128xf32, #tpu.memory_space<vmem>>) attributes {dimension_semantics = [#tpu.dimension_semantics<parallel>], iteration_bounds = array<i64: 4>, scalar_prefetch = 0 : i64, scratch_operands = 0 : i64, tpu.core_type = #tpu.core_type<tc>, window_params = [{transform_indices = @transform_0, window_bounds = array<i64: 512, 16>}, {pipeline_mode = #tpu.pipeline_mode<synchronous>, transform_indices = @transform_1, window_bounds = array<i64: 16, 128>}, {pipeline_mode = #tpu.pipeline_mode<synchronous>, transform_indices = @transform_2, window_bounds = array<i64: 1, 128>}, {transform_indices = @transform_3, window_bounds = array<i64: 512, 128>}]} {
    %c0 = arith.constant 0 : index
    %c0_0 = arith.constant 0 : index
    %0 = vector.load %arg1[%c0, %c0_0] : memref<512x16xbf16, #tpu.memory_space<vmem>>, vector<512x16xbf16>
    %c0_1 = arith.constant 0 : index
    %c0_2 = arith.constant 0 : index
    %1 = vector.load %arg2[%c0_1, %c0_2] : memref<16x128xbf16, #tpu.memory_space<vmem>>, vector<16x128xbf16>
    %cst = arith.constant dense<0.000000e+00> : vector<512x128xf32>
    %2 = tpu.matmul %0, %1, %cst {dimension_numbers = #tpu.dot_dimension_numbers<[1], [0], [0], [1], [0, 0, 1, 1], [], []>} : vector<512x16xbf16>, vector<16x128xbf16>, vector<512x128xf32> -> vector<512x128xf32>
    %c0_3 = arith.constant 0 : index
    %c0_4 = arith.constant 0 : index
    %3 = vector.load %arg3[%c0_3, %c0_4] : memref<1x128xf32, #tpu.memory_space<vmem>>, vector<1x128xf32>
    %4 = vector.broadcast %3 : vector<1x128xf32> to vector<512x128xf32>
    %5 = arith.addf %2, %4 : vector<512x128xf32>
    %cst_5 = arith.constant 0.000000e+00 : f32
    %6 = vector.broadcast %cst_5 : f32 to vector<512x128xf32>
    %7 = arith.maximumf %5, %6 : vector<512x128xf32>
    %c0_6 = arith.constant 0 : index
    %c0_7 = arith.constant 0 : index
    %8 = vector.load %arg4[%c0_6, %c0_7] : memref<512x128xf32, #tpu.memory_space<vmem>>, vector<512x128xf32>
    tpu.vector_store %arg4[%c0_6, %c0_7], %7 {strides = array<i32>} : memref<512x128xf32, #tpu.memory_space<vmem>>, vector<512x128xf32>,
    return
  }
  func.func @transform_0(%arg0: i32) -> (i32, i32) {
    %c0_i32 = arith.constant 0 : i32
    %c0_i32_0 = arith.constant 0 : i32
    return %arg0, %c0_i32 : i32, i32
  }
  func.func @transform_1(%arg0: i32) -> (i32, i32) {
    %c0_i32 = arith.constant 0 : i32
    %c0_i32_0 = arith.constant 0 : i32
    %c0_i32_1 = arith.constant 0 : i32
    return %c0_i32, %c0_i32_0 : i32, i32
  }
  func.func @transform_2(%arg0: i32) -> (i32, i32) {
    %c0_i32 = arith.constant 0 : i32
    %c0_i32_0 = arith.constant 0 : i32
    %c0_i32_1 = arith.constant 0 : i32
    return %c0_i32, %c0_i32_0 : i32, i32
  }
  func.func @transform_3(%arg0: i32) -> (i32, i32) {
    %c0_i32 = arith.constant 0 : i32
    %c0_i32_0 = arith.constant 0 : i32
    return %arg0, %c0_i32 : i32, i32
  }
}

module attributes {stable_mosaic.version = 11 : i64} {
  func.func @_maxpool_kernel(%arg0: i32, %arg1: memref<32x512xf32, #tpu.memory_space<vmem>>, %arg2: memref<32x512xf32, #tpu.memory_space<vmem>>, %arg3: memref<32x512xf32, #tpu.memory_space<vmem>>, %arg4: memref<32x512xf32, #tpu.memory_space<vmem>>, %arg5: memref<32x512xf32, #tpu.memory_space<vmem>>) attributes {dimension_semantics = [#tpu.dimension_semantics<arbitrary>], iteration_bounds = array<i64: 1>, scalar_prefetch = 0 : i64, scratch_operands = 0 : i64, tpu.core_type = #tpu.core_type<tc>, window_params = [{pipeline_mode = #tpu.pipeline_mode<synchronous>, transform_indices = @transform_0, window_bounds = array<i64: 32, 512>}, {pipeline_mode = #tpu.pipeline_mode<synchronous>, transform_indices = @transform_1, window_bounds = array<i64: 32, 512>}, {pipeline_mode = #tpu.pipeline_mode<synchronous>, transform_indices = @transform_2, window_bounds = array<i64: 32, 512>}, {pipeline_mode = #tpu.pipeline_mode<synchronous>, transform_indices = @transform_3, window_bounds = array<i64: 32, 512>}, {pipeline_mode = #tpu.pipeline_mode<synchronous>, transform_indices = @transform_4, window_bounds = array<i64: 32, 512>}]} {
    %c0 = arith.constant 0 : index
    %c0_0 = arith.constant 0 : index
    %0 = vector.load %arg1[%c0, %c0_0] : memref<32x512xf32, #tpu.memory_space<vmem>>, vector<32x512xf32>
    %c0_1 = arith.constant 0 : index
    %c0_2 = arith.constant 0 : index
    %1 = vector.load %arg2[%c0_1, %c0_2] : memref<32x512xf32, #tpu.memory_space<vmem>>, vector<32x512xf32>
    %2 = arith.maximumf %0, %1 : vector<32x512xf32>
    %c0_3 = arith.constant 0 : index
    %c0_4 = arith.constant 0 : index
    %3 = vector.load %arg3[%c0_3, %c0_4] : memref<32x512xf32, #tpu.memory_space<vmem>>, vector<32x512xf32>
    %c0_5 = arith.constant 0 : index
    %c0_6 = arith.constant 0 : index
    %4 = vector.load %arg4[%c0_5, %c0_6] : memref<32x512xf32, #tpu.memory_space<vmem>>, vector<32x512xf32>
    %5 = arith.maximumf %3, %4 : vector<32x512xf32>
    %6 = arith.maximumf %2, %5 : vector<32x512xf32>
    %c0_7 = arith.constant 0 : index
    %c0_8 = arith.constant 0 : index
    %7 = vector.load %arg5[%c0_7, %c0_8] : memref<32x512xf32, #tpu.memory_space<vmem>>, vector<32x512xf32>
    tpu.vector_store %arg5[%c0_7, %c0_8], %6 {strides = array<i32>} : memref<32x512xf32, #tpu.memory_space<vmem>>, vector<32x512xf32>,
    return
  }
  func.func @transform_0(%arg0: i32) -> (i32, i32) {
    %c0_i32 = arith.constant 0 : i32
    %c0_i32_0 = arith.constant 0 : i32
    %c0_i32_1 = arith.constant 0 : i32
    return %c0_i32, %c0_i32_0 : i32, i32
  }
  func.func @transform_1(%arg0: i32) -> (i32, i32) {
    %c0_i32 = arith.constant 0 : i32
    %c0_i32_0 = arith.constant 0 : i32
    %c0_i32_1 = arith.constant 0 : i32
    return %c0_i32, %c0_i32_0 : i32, i32
  }
  func.func @transform_2(%arg0: i32) -> (i32, i32) {
    %c0_i32 = arith.constant 0 : i32
    %c0_i32_0 = arith.constant 0 : i32
    %c0_i32_1 = arith.constant 0 : i32
    return %c0_i32, %c0_i32_0 : i32, i32
  }
  func.func @transform_3(%arg0: i32) -> (i32, i32) {
    %c0_i32 = arith.constant 0 : i32
    %c0_i32_0 = arith.constant 0 : i32
    %c0_i32_1 = arith.constant 0 : i32
    return %c0_i32, %c0_i32_0 : i32, i32
  }
  func.func @transform_4(%arg0: i32) -> (i32, i32) {
    %c0_i32 = arith.constant 0 : i32
    %c0_i32_0 = arith.constant 0 : i32
    %c0_i32_1 = arith.constant 0 : i32
    return %c0_i32, %c0_i32_0 : i32, i32
  }
}

module attributes {stable_mosaic.version = 11 : i64} {
  func.func @kernel(%arg0: i32, %arg1: memref<176x128xbf16, #tpu.memory_space<vmem>>, %arg2: memref<128x128xbf16, #tpu.memory_space<vmem>>, %arg3: memref<1x128xf32, #tpu.memory_space<vmem>>, %arg4: memref<176x128xf32, #tpu.memory_space<vmem>>) attributes {dimension_semantics = [#tpu.dimension_semantics<parallel>], iteration_bounds = array<i64: 1>, scalar_prefetch = 0 : i64, scratch_operands = 0 : i64, tpu.core_type = #tpu.core_type<tc>, window_params = [{transform_indices = @transform_0, window_bounds = array<i64: 176, 128>}, {pipeline_mode = #tpu.pipeline_mode<synchronous>, transform_indices = @transform_1, window_bounds = array<i64: 128, 128>}, {pipeline_mode = #tpu.pipeline_mode<synchronous>, transform_indices = @transform_2, window_bounds = array<i64: 1, 128>}, {transform_indices = @transform_3, window_bounds = array<i64: 176, 128>}]} {
    %c0 = arith.constant 0 : index
    %c0_0 = arith.constant 0 : index
    %0 = vector.load %arg1[%c0, %c0_0] : memref<176x128xbf16, #tpu.memory_space<vmem>>, vector<176x128xbf16>
    %c0_1 = arith.constant 0 : index
    %c0_2 = arith.constant 0 : index
    %1 = vector.load %arg2[%c0_1, %c0_2] : memref<128x128xbf16, #tpu.memory_space<vmem>>, vector<128x128xbf16>
    %cst = arith.constant dense<0.000000e+00> : vector<176x128xf32>
    %2 = tpu.matmul %0, %1, %cst {dimension_numbers = #tpu.dot_dimension_numbers<[1], [0], [0], [1], [0, 0, 1, 1], [], []>} : vector<176x128xbf16>, vector<128x128xbf16>, vector<176x128xf32> -> vector<176x128xf32>
    %c0_3 = arith.constant 0 : index
    %c0_4 = arith.constant 0 : index
    %3 = vector.load %arg3[%c0_3, %c0_4] : memref<1x128xf32, #tpu.memory_space<vmem>>, vector<1x128xf32>
    %4 = vector.broadcast %3 : vector<1x128xf32> to vector<176x128xf32>
    %5 = arith.addf %2, %4 : vector<176x128xf32>
    %cst_5 = arith.constant 0.000000e+00 : f32
    %6 = vector.broadcast %cst_5 : f32 to vector<176x128xf32>
    %7 = arith.maximumf %5, %6 : vector<176x128xf32>
    %c0_6 = arith.constant 0 : index
    %c0_7 = arith.constant 0 : index
    %8 = vector.load %arg4[%c0_6, %c0_7] : memref<176x128xf32, #tpu.memory_space<vmem>>, vector<176x128xf32>
    tpu.vector_store %arg4[%c0_6, %c0_7], %7 {strides = array<i32>} : memref<176x128xf32, #tpu.memory_space<vmem>>, vector<176x128xf32>,
    return
  }
  func.func @transform_0(%arg0: i32) -> (i32, i32) {
    %c0_i32 = arith.constant 0 : i32
    %c0_i32_0 = arith.constant 0 : i32
    return %arg0, %c0_i32 : i32, i32
  }
  func.func @transform_1(%arg0: i32) -> (i32, i32) {
    %c0_i32 = arith.constant 0 : i32
    %c0_i32_0 = arith.constant 0 : i32
    %c0_i32_1 = arith.constant 0 : i32
    return %c0_i32, %c0_i32_0 : i32, i32
  }
  func.func @transform_2(%arg0: i32) -> (i32, i32) {
    %c0_i32 = arith.constant 0 : i32
    %c0_i32_0 = arith.constant 0 : i32
    %c0_i32_1 = arith.constant 0 : i32
    return %c0_i32, %c0_i32_0 : i32, i32
  }
  func.func @transform_3(%arg0: i32) -> (i32, i32) {
    %c0_i32 = arith.constant 0 : i32
    %c0_i32_0 = arith.constant 0 : i32
    return %arg0, %c0_i32 : i32, i32
  }
}

module attributes {stable_mosaic.version = 11 : i64} {
  func.func @_maxpool_kernel(%arg0: i32, %arg1: memref<8x256xf32, #tpu.memory_space<vmem>>, %arg2: memref<8x256xf32, #tpu.memory_space<vmem>>, %arg3: memref<8x256xf32, #tpu.memory_space<vmem>>, %arg4: memref<8x256xf32, #tpu.memory_space<vmem>>, %arg5: memref<8x256xf32, #tpu.memory_space<vmem>>) attributes {dimension_semantics = [#tpu.dimension_semantics<arbitrary>], iteration_bounds = array<i64: 1>, scalar_prefetch = 0 : i64, scratch_operands = 0 : i64, tpu.core_type = #tpu.core_type<tc>, window_params = [{pipeline_mode = #tpu.pipeline_mode<synchronous>, transform_indices = @transform_0, window_bounds = array<i64: 8, 256>}, {pipeline_mode = #tpu.pipeline_mode<synchronous>, transform_indices = @transform_1, window_bounds = array<i64: 8, 256>}, {pipeline_mode = #tpu.pipeline_mode<synchronous>, transform_indices = @transform_2, window_bounds = array<i64: 8, 256>}, {pipeline_mode = #tpu.pipeline_mode<synchronous>, transform_indices = @transform_3, window_bounds = array<i64: 8, 256>}, {pipeline_mode = #tpu.pipeline_mode<synchronous>, transform_indices = @transform_4, window_bounds = array<i64: 8, 256>}]} {
    %c0 = arith.constant 0 : index
    %c0_0 = arith.constant 0 : index
    %0 = vector.load %arg1[%c0, %c0_0] : memref<8x256xf32, #tpu.memory_space<vmem>>, vector<8x256xf32>
    %c0_1 = arith.constant 0 : index
    %c0_2 = arith.constant 0 : index
    %1 = vector.load %arg2[%c0_1, %c0_2] : memref<8x256xf32, #tpu.memory_space<vmem>>, vector<8x256xf32>
    %2 = arith.maximumf %0, %1 : vector<8x256xf32>
    %c0_3 = arith.constant 0 : index
    %c0_4 = arith.constant 0 : index
    %3 = vector.load %arg3[%c0_3, %c0_4] : memref<8x256xf32, #tpu.memory_space<vmem>>, vector<8x256xf32>
    %c0_5 = arith.constant 0 : index
    %c0_6 = arith.constant 0 : index
    %4 = vector.load %arg4[%c0_5, %c0_6] : memref<8x256xf32, #tpu.memory_space<vmem>>, vector<8x256xf32>
    %5 = arith.maximumf %3, %4 : vector<8x256xf32>
    %6 = arith.maximumf %2, %5 : vector<8x256xf32>
    %c0_7 = arith.constant 0 : index
    %c0_8 = arith.constant 0 : index
    %7 = vector.load %arg5[%c0_7, %c0_8] : memref<8x256xf32, #tpu.memory_space<vmem>>, vector<8x256xf32>
    tpu.vector_store %arg5[%c0_7, %c0_8], %6 {strides = array<i32>} : memref<8x256xf32, #tpu.memory_space<vmem>>, vector<8x256xf32>,
    return
  }
  func.func @transform_0(%arg0: i32) -> (i32, i32) {
    %c0_i32 = arith.constant 0 : i32
    %c0_i32_0 = arith.constant 0 : i32
    %c0_i32_1 = arith.constant 0 : i32
    return %c0_i32, %c0_i32_0 : i32, i32
  }
  func.func @transform_1(%arg0: i32) -> (i32, i32) {
    %c0_i32 = arith.constant 0 : i32
    %c0_i32_0 = arith.constant 0 : i32
    %c0_i32_1 = arith.constant 0 : i32
    return %c0_i32, %c0_i32_0 : i32, i32
  }
  func.func @transform_2(%arg0: i32) -> (i32, i32) {
    %c0_i32 = arith.constant 0 : i32
    %c0_i32_0 = arith.constant 0 : i32
    %c0_i32_1 = arith.constant 0 : i32
    return %c0_i32, %c0_i32_0 : i32, i32
  }
  func.func @transform_3(%arg0: i32) -> (i32, i32) {
    %c0_i32 = arith.constant 0 : i32
    %c0_i32_0 = arith.constant 0 : i32
    %c0_i32_1 = arith.constant 0 : i32
    return %c0_i32, %c0_i32_0 : i32, i32
  }
  func.func @transform_4(%arg0: i32) -> (i32, i32) {
    %c0_i32 = arith.constant 0 : i32
    %c0_i32_0 = arith.constant 0 : i32
    %c0_i32_1 = arith.constant 0 : i32
    return %c0_i32, %c0_i32_0 : i32, i32
  }
}

module attributes {stable_mosaic.version = 11 : i64} {
  func.func @kernel(%arg0: i32, %arg1: memref<16x576xbf16, #tpu.memory_space<vmem>>, %arg2: memref<576x128xbf16, #tpu.memory_space<vmem>>, %arg3: memref<1x128xf32, #tpu.memory_space<vmem>>, %arg4: memref<16x128xf32, #tpu.memory_space<vmem>>) attributes {dimension_semantics = [#tpu.dimension_semantics<parallel>], iteration_bounds = array<i64: 1>, scalar_prefetch = 0 : i64, scratch_operands = 0 : i64, tpu.core_type = #tpu.core_type<tc>, window_params = [{transform_indices = @transform_0, window_bounds = array<i64: 16, 576>}, {pipeline_mode = #tpu.pipeline_mode<synchronous>, transform_indices = @transform_1, window_bounds = array<i64: 576, 128>}, {pipeline_mode = #tpu.pipeline_mode<synchronous>, transform_indices = @transform_2, window_bounds = array<i64: 1, 128>}, {transform_indices = @transform_3, window_bounds = array<i64: 16, 128>}]} {
    %c0 = arith.constant 0 : index
    %c0_0 = arith.constant 0 : index
    %0 = vector.load %arg1[%c0, %c0_0] : memref<16x576xbf16, #tpu.memory_space<vmem>>, vector<16x576xbf16>
    %c0_1 = arith.constant 0 : index
    %c0_2 = arith.constant 0 : index
    %1 = vector.load %arg2[%c0_1, %c0_2] : memref<576x128xbf16, #tpu.memory_space<vmem>>, vector<576x128xbf16>
    %cst = arith.constant dense<0.000000e+00> : vector<16x128xf32>
    %2 = tpu.matmul %0, %1, %cst {dimension_numbers = #tpu.dot_dimension_numbers<[1], [0], [0], [1], [0, 0, 1, 1], [], []>} : vector<16x576xbf16>, vector<576x128xbf16>, vector<16x128xf32> -> vector<16x128xf32>
    %c0_3 = arith.constant 0 : index
    %c0_4 = arith.constant 0 : index
    %3 = vector.load %arg3[%c0_3, %c0_4] : memref<1x128xf32, #tpu.memory_space<vmem>>, vector<1x128xf32>
    %4 = vector.broadcast %3 : vector<1x128xf32> to vector<16x128xf32>
    %5 = arith.addf %2, %4 : vector<16x128xf32>
    %cst_5 = arith.constant 0.000000e+00 : f32
    %6 = vector.broadcast %cst_5 : f32 to vector<16x128xf32>
    %7 = arith.maximumf %5, %6 : vector<16x128xf32>
    %c0_6 = arith.constant 0 : index
    %c0_7 = arith.constant 0 : index
    %8 = vector.load %arg4[%c0_6, %c0_7] : memref<16x128xf32, #tpu.memory_space<vmem>>, vector<16x128xf32>
    tpu.vector_store %arg4[%c0_6, %c0_7], %7 {strides = array<i32>} : memref<16x128xf32, #tpu.memory_space<vmem>>, vector<16x128xf32>,
    return
  }
  func.func @transform_0(%arg0: i32) -> (i32, i32) {
    %c0_i32 = arith.constant 0 : i32
    %c0_i32_0 = arith.constant 0 : i32
    return %arg0, %c0_i32 : i32, i32
  }
  func.func @transform_1(%arg0: i32) -> (i32, i32) {
    %c0_i32 = arith.constant 0 : i32
    %c0_i32_0 = arith.constant 0 : i32
    %c0_i32_1 = arith.constant 0 : i32
    return %c0_i32, %c0_i32_0 : i32, i32
  }
  func.func @transform_2(%arg0: i32) -> (i32, i32) {
    %c0_i32 = arith.constant 0 : i32
    %c0_i32_0 = arith.constant 0 : i32
    %c0_i32_1 = arith.constant 0 : i32
    return %c0_i32, %c0_i32_0 : i32, i32
  }
  func.func @transform_3(%arg0: i32) -> (i32, i32) {
    %c0_i32 = arith.constant 0 : i32
    %c0_i32_0 = arith.constant 0 : i32
    return %arg0, %c0_i32 : i32, i32
  }
}

module attributes {stable_mosaic.version = 11 : i64} {
  func.func @_maxpool_kernel(%arg0: i32, %arg1: memref<2x128xf32, #tpu.memory_space<vmem>>, %arg2: memref<2x128xf32, #tpu.memory_space<vmem>>, %arg3: memref<2x128xf32, #tpu.memory_space<vmem>>, %arg4: memref<2x128xf32, #tpu.memory_space<vmem>>, %arg5: memref<2x128xf32, #tpu.memory_space<vmem>>) attributes {dimension_semantics = [#tpu.dimension_semantics<arbitrary>], iteration_bounds = array<i64: 1>, scalar_prefetch = 0 : i64, scratch_operands = 0 : i64, tpu.core_type = #tpu.core_type<tc>, window_params = [{pipeline_mode = #tpu.pipeline_mode<synchronous>, transform_indices = @transform_0, window_bounds = array<i64: 2, 128>}, {pipeline_mode = #tpu.pipeline_mode<synchronous>, transform_indices = @transform_1, window_bounds = array<i64: 2, 128>}, {pipeline_mode = #tpu.pipeline_mode<synchronous>, transform_indices = @transform_2, window_bounds = array<i64: 2, 128>}, {pipeline_mode = #tpu.pipeline_mode<synchronous>, transform_indices = @transform_3, window_bounds = array<i64: 2, 128>}, {pipeline_mode = #tpu.pipeline_mode<synchronous>, transform_indices = @transform_4, window_bounds = array<i64: 2, 128>}]} {
    %c0 = arith.constant 0 : index
    %c0_0 = arith.constant 0 : index
    %0 = vector.load %arg1[%c0, %c0_0] : memref<2x128xf32, #tpu.memory_space<vmem>>, vector<2x128xf32>
    %c0_1 = arith.constant 0 : index
    %c0_2 = arith.constant 0 : index
    %1 = vector.load %arg2[%c0_1, %c0_2] : memref<2x128xf32, #tpu.memory_space<vmem>>, vector<2x128xf32>
    %2 = arith.maximumf %0, %1 : vector<2x128xf32>
    %c0_3 = arith.constant 0 : index
    %c0_4 = arith.constant 0 : index
    %3 = vector.load %arg3[%c0_3, %c0_4] : memref<2x128xf32, #tpu.memory_space<vmem>>, vector<2x128xf32>
    %c0_5 = arith.constant 0 : index
    %c0_6 = arith.constant 0 : index
    %4 = vector.load %arg4[%c0_5, %c0_6] : memref<2x128xf32, #tpu.memory_space<vmem>>, vector<2x128xf32>
    %5 = arith.maximumf %3, %4 : vector<2x128xf32>
    %6 = arith.maximumf %2, %5 : vector<2x128xf32>
    %c0_7 = arith.constant 0 : index
    %c0_8 = arith.constant 0 : index
    %7 = vector.load %arg5[%c0_7, %c0_8] : memref<2x128xf32, #tpu.memory_space<vmem>>, vector<2x128xf32>
    tpu.vector_store %arg5[%c0_7, %c0_8], %6 {strides = array<i32>} : memref<2x128xf32, #tpu.memory_space<vmem>>, vector<2x128xf32>,
    return
  }
  func.func @transform_0(%arg0: i32) -> (i32, i32) {
    %c0_i32 = arith.constant 0 : i32
    %c0_i32_0 = arith.constant 0 : i32
    %c0_i32_1 = arith.constant 0 : i32
    return %c0_i32, %c0_i32_0 : i32, i32
  }
  func.func @transform_1(%arg0: i32) -> (i32, i32) {
    %c0_i32 = arith.constant 0 : i32
    %c0_i32_0 = arith.constant 0 : i32
    %c0_i32_1 = arith.constant 0 : i32
    return %c0_i32, %c0_i32_0 : i32, i32
  }
  func.func @transform_2(%arg0: i32) -> (i32, i32) {
    %c0_i32 = arith.constant 0 : i32
    %c0_i32_0 = arith.constant 0 : i32
    %c0_i32_1 = arith.constant 0 : i32
    return %c0_i32, %c0_i32_0 : i32, i32
  }
  func.func @transform_3(%arg0: i32) -> (i32, i32) {
    %c0_i32 = arith.constant 0 : i32
    %c0_i32_0 = arith.constant 0 : i32
    %c0_i32_1 = arith.constant 0 : i32
    return %c0_i32, %c0_i32_0 : i32, i32
  }
  func.func @transform_4(%arg0: i32) -> (i32, i32) {
    %c0_i32 = arith.constant 0 : i32
    %c0_i32_0 = arith.constant 0 : i32
    %c0_i32_1 = arith.constant 0 : i32
    return %c0_i32, %c0_i32_0 : i32, i32
  }
}

module attributes {stable_mosaic.version = 11 : i64} {
  func.func @kernel(%arg0: i32, %arg1: memref<16x512xbf16, #tpu.memory_space<vmem>>, %arg2: memref<512x256xbf16, #tpu.memory_space<vmem>>, %arg3: memref<1x256xf32, #tpu.memory_space<vmem>>, %arg4: memref<16x256xf32, #tpu.memory_space<vmem>>) attributes {dimension_semantics = [#tpu.dimension_semantics<parallel>], iteration_bounds = array<i64: 1>, scalar_prefetch = 0 : i64, scratch_operands = 0 : i64, tpu.core_type = #tpu.core_type<tc>, window_params = [{transform_indices = @transform_0, window_bounds = array<i64: 16, 512>}, {pipeline_mode = #tpu.pipeline_mode<synchronous>, transform_indices = @transform_1, window_bounds = array<i64: 512, 256>}, {pipeline_mode = #tpu.pipeline_mode<synchronous>, transform_indices = @transform_2, window_bounds = array<i64: 1, 256>}, {transform_indices = @transform_3, window_bounds = array<i64: 16, 256>}]} {
    %c0 = arith.constant 0 : index
    %c0_0 = arith.constant 0 : index
    %0 = vector.load %arg1[%c0, %c0_0] : memref<16x512xbf16, #tpu.memory_space<vmem>>, vector<16x512xbf16>
    %c0_1 = arith.constant 0 : index
    %c0_2 = arith.constant 0 : index
    %1 = vector.load %arg2[%c0_1, %c0_2] : memref<512x256xbf16, #tpu.memory_space<vmem>>, vector<512x256xbf16>
    %cst = arith.constant dense<0.000000e+00> : vector<16x256xf32>
    %2 = tpu.matmul %0, %1, %cst {dimension_numbers = #tpu.dot_dimension_numbers<[1], [0], [0], [1], [0, 0, 1, 1], [], []>} : vector<16x512xbf16>, vector<512x256xbf16>, vector<16x256xf32> -> vector<16x256xf32>
    %c0_3 = arith.constant 0 : index
    %c0_4 = arith.constant 0 : index
    %3 = vector.load %arg3[%c0_3, %c0_4] : memref<1x256xf32, #tpu.memory_space<vmem>>, vector<1x256xf32>
    %4 = vector.broadcast %3 : vector<1x256xf32> to vector<16x256xf32>
    %5 = arith.addf %2, %4 : vector<16x256xf32>
    %cst_5 = arith.constant 0.000000e+00 : f32
    %6 = vector.broadcast %cst_5 : f32 to vector<16x256xf32>
    %7 = arith.maximumf %5, %6 : vector<16x256xf32>
    %c0_6 = arith.constant 0 : index
    %c0_7 = arith.constant 0 : index
    %8 = vector.load %arg4[%c0_6, %c0_7] : memref<16x256xf32, #tpu.memory_space<vmem>>, vector<16x256xf32>
    tpu.vector_store %arg4[%c0_6, %c0_7], %7 {strides = array<i32>} : memref<16x256xf32, #tpu.memory_space<vmem>>, vector<16x256xf32>,
    return
  }
  func.func @transform_0(%arg0: i32) -> (i32, i32) {
    %c0_i32 = arith.constant 0 : i32
    %c0_i32_0 = arith.constant 0 : i32
    return %arg0, %c0_i32 : i32, i32
  }
  func.func @transform_1(%arg0: i32) -> (i32, i32) {
    %c0_i32 = arith.constant 0 : i32
    %c0_i32_0 = arith.constant 0 : i32
    %c0_i32_1 = arith.constant 0 : i32
    return %c0_i32, %c0_i32_0 : i32, i32
  }
  func.func @transform_2(%arg0: i32) -> (i32, i32) {
    %c0_i32 = arith.constant 0 : i32
    %c0_i32_0 = arith.constant 0 : i32
    %c0_i32_1 = arith.constant 0 : i32
    return %c0_i32, %c0_i32_0 : i32, i32
  }
  func.func @transform_3(%arg0: i32) -> (i32, i32) {
    %c0_i32 = arith.constant 0 : i32
    %c0_i32_0 = arith.constant 0 : i32
    return %arg0, %c0_i32 : i32, i32
  }
}

module attributes {stable_mosaic.version = 11 : i64} {
  func.func @kernel(%arg0: i32, %arg1: memref<64x256xbf16, #tpu.memory_space<vmem>>, %arg2: memref<256x128xbf16, #tpu.memory_space<vmem>>, %arg3: memref<1x128xf32, #tpu.memory_space<vmem>>, %arg4: memref<64x128xf32, #tpu.memory_space<vmem>>) attributes {dimension_semantics = [#tpu.dimension_semantics<parallel>], iteration_bounds = array<i64: 1>, scalar_prefetch = 0 : i64, scratch_operands = 0 : i64, tpu.core_type = #tpu.core_type<tc>, window_params = [{transform_indices = @transform_0, window_bounds = array<i64: 64, 256>}, {pipeline_mode = #tpu.pipeline_mode<synchronous>, transform_indices = @transform_1, window_bounds = array<i64: 256, 128>}, {pipeline_mode = #tpu.pipeline_mode<synchronous>, transform_indices = @transform_2, window_bounds = array<i64: 1, 128>}, {transform_indices = @transform_3, window_bounds = array<i64: 64, 128>}]} {
    %c0 = arith.constant 0 : index
    %c0_0 = arith.constant 0 : index
    %0 = vector.load %arg1[%c0, %c0_0] : memref<64x256xbf16, #tpu.memory_space<vmem>>, vector<64x256xbf16>
    %c0_1 = arith.constant 0 : index
    %c0_2 = arith.constant 0 : index
    %1 = vector.load %arg2[%c0_1, %c0_2] : memref<256x128xbf16, #tpu.memory_space<vmem>>, vector<256x128xbf16>
    %cst = arith.constant dense<0.000000e+00> : vector<64x128xf32>
    %2 = tpu.matmul %0, %1, %cst {dimension_numbers = #tpu.dot_dimension_numbers<[1], [0], [0], [1], [0, 0, 1, 1], [], []>} : vector<64x256xbf16>, vector<256x128xbf16>, vector<64x128xf32> -> vector<64x128xf32>
    %c0_3 = arith.constant 0 : index
    %c0_4 = arith.constant 0 : index
    %3 = vector.load %arg3[%c0_3, %c0_4] : memref<1x128xf32, #tpu.memory_space<vmem>>, vector<1x128xf32>
    %4 = vector.broadcast %3 : vector<1x128xf32> to vector<64x128xf32>
    %5 = arith.addf %2, %4 : vector<64x128xf32>
    %cst_5 = arith.constant 0.000000e+00 : f32
    %6 = vector.broadcast %cst_5 : f32 to vector<64x128xf32>
    %7 = arith.maximumf %5, %6 : vector<64x128xf32>
    %c0_6 = arith.constant 0 : index
    %c0_7 = arith.constant 0 : index
    %8 = vector.load %arg4[%c0_6, %c0_7] : memref<64x128xf32, #tpu.memory_space<vmem>>, vector<64x128xf32>
    tpu.vector_store %arg4[%c0_6, %c0_7], %7 {strides = array<i32>} : memref<64x128xf32, #tpu.memory_space<vmem>>, vector<64x128xf32>,
    return
  }
  func.func @transform_0(%arg0: i32) -> (i32, i32) {
    %c0_i32 = arith.constant 0 : i32
    %c0_i32_0 = arith.constant 0 : i32
    return %arg0, %c0_i32 : i32, i32
  }
  func.func @transform_1(%arg0: i32) -> (i32, i32) {
    %c0_i32 = arith.constant 0 : i32
    %c0_i32_0 = arith.constant 0 : i32
    %c0_i32_1 = arith.constant 0 : i32
    return %c0_i32, %c0_i32_0 : i32, i32
  }
  func.func @transform_2(%arg0: i32) -> (i32, i32) {
    %c0_i32 = arith.constant 0 : i32
    %c0_i32_0 = arith.constant 0 : i32
    %c0_i32_1 = arith.constant 0 : i32
    return %c0_i32, %c0_i32_0 : i32, i32
  }
  func.func @transform_3(%arg0: i32) -> (i32, i32) {
    %c0_i32 = arith.constant 0 : i32
    %c0_i32_0 = arith.constant 0 : i32
    return %arg0, %c0_i32 : i32, i32
  }
}

module attributes {stable_mosaic.version = 11 : i64} {
  func.func @kernel(%arg0: i32, %arg1: memref<256x128xbf16, #tpu.memory_space<vmem>>, %arg2: memref<128x256xbf16, #tpu.memory_space<vmem>>, %arg3: memref<1x256xf32, #tpu.memory_space<vmem>>, %arg4: memref<256x256xf32, #tpu.memory_space<vmem>>) attributes {dimension_semantics = [#tpu.dimension_semantics<parallel>], iteration_bounds = array<i64: 1>, scalar_prefetch = 0 : i64, scratch_operands = 0 : i64, tpu.core_type = #tpu.core_type<tc>, window_params = [{transform_indices = @transform_0, window_bounds = array<i64: 256, 128>}, {pipeline_mode = #tpu.pipeline_mode<synchronous>, transform_indices = @transform_1, window_bounds = array<i64: 128, 256>}, {pipeline_mode = #tpu.pipeline_mode<synchronous>, transform_indices = @transform_2, window_bounds = array<i64: 1, 256>}, {transform_indices = @transform_3, window_bounds = array<i64: 256, 256>}]} {
    %c0 = arith.constant 0 : index
    %c0_0 = arith.constant 0 : index
    %0 = vector.load %arg1[%c0, %c0_0] : memref<256x128xbf16, #tpu.memory_space<vmem>>, vector<256x128xbf16>
    %c0_1 = arith.constant 0 : index
    %c0_2 = arith.constant 0 : index
    %1 = vector.load %arg2[%c0_1, %c0_2] : memref<128x256xbf16, #tpu.memory_space<vmem>>, vector<128x256xbf16>
    %cst = arith.constant dense<0.000000e+00> : vector<256x256xf32>
    %2 = tpu.matmul %0, %1, %cst {dimension_numbers = #tpu.dot_dimension_numbers<[1], [0], [0], [1], [0, 0, 1, 1], [], []>} : vector<256x128xbf16>, vector<128x256xbf16>, vector<256x256xf32> -> vector<256x256xf32>
    %c0_3 = arith.constant 0 : index
    %c0_4 = arith.constant 0 : index
    %3 = vector.load %arg3[%c0_3, %c0_4] : memref<1x256xf32, #tpu.memory_space<vmem>>, vector<1x256xf32>
    %4 = vector.broadcast %3 : vector<1x256xf32> to vector<256x256xf32>
    %5 = arith.addf %2, %4 : vector<256x256xf32>
    %cst_5 = arith.constant 0.000000e+00 : f32
    %6 = vector.broadcast %cst_5 : f32 to vector<256x256xf32>
    %7 = arith.maximumf %5, %6 : vector<256x256xf32>
    %c0_6 = arith.constant 0 : index
    %c0_7 = arith.constant 0 : index
    %8 = vector.load %arg4[%c0_6, %c0_7] : memref<256x256xf32, #tpu.memory_space<vmem>>, vector<256x256xf32>
    tpu.vector_store %arg4[%c0_6, %c0_7], %7 {strides = array<i32>} : memref<256x256xf32, #tpu.memory_space<vmem>>, vector<256x256xf32>,
    return
  }
  func.func @transform_0(%arg0: i32) -> (i32, i32) {
    %c0_i32 = arith.constant 0 : i32
    %c0_i32_0 = arith.constant 0 : i32
    return %arg0, %c0_i32 : i32, i32
  }
  func.func @transform_1(%arg0: i32) -> (i32, i32) {
    %c0_i32 = arith.constant 0 : i32
    %c0_i32_0 = arith.constant 0 : i32
    %c0_i32_1 = arith.constant 0 : i32
    return %c0_i32, %c0_i32_0 : i32, i32
  }
  func.func @transform_2(%arg0: i32) -> (i32, i32) {
    %c0_i32 = arith.constant 0 : i32
    %c0_i32_0 = arith.constant 0 : i32
    %c0_i32_1 = arith.constant 0 : i32
    return %c0_i32, %c0_i32_0 : i32, i32
  }
  func.func @transform_3(%arg0: i32) -> (i32, i32) {
    %c0_i32 = arith.constant 0 : i32
    %c0_i32_0 = arith.constant 0 : i32
    return %arg0, %c0_i32 : i32, i32
  }
}

module attributes {stable_mosaic.version = 11 : i64} {
  func.func @kernel(%arg0: i32, %arg1: memref<656x16xbf16, #tpu.memory_space<vmem>>, %arg2: memref<16x128xbf16, #tpu.memory_space<vmem>>, %arg3: memref<1x128xf32, #tpu.memory_space<vmem>>, %arg4: memref<656x128xf32, #tpu.memory_space<vmem>>) attributes {dimension_semantics = [#tpu.dimension_semantics<parallel>], iteration_bounds = array<i64: 1>, scalar_prefetch = 0 : i64, scratch_operands = 0 : i64, tpu.core_type = #tpu.core_type<tc>, window_params = [{transform_indices = @transform_0, window_bounds = array<i64: 656, 16>}, {pipeline_mode = #tpu.pipeline_mode<synchronous>, transform_indices = @transform_1, window_bounds = array<i64: 16, 128>}, {pipeline_mode = #tpu.pipeline_mode<synchronous>, transform_indices = @transform_2, window_bounds = array<i64: 1, 128>}, {transform_indices = @transform_3, window_bounds = array<i64: 656, 128>}]} {
    %c0 = arith.constant 0 : index
    %c0_0 = arith.constant 0 : index
    %0 = vector.load %arg1[%c0, %c0_0] : memref<656x16xbf16, #tpu.memory_space<vmem>>, vector<656x16xbf16>
    %c0_1 = arith.constant 0 : index
    %c0_2 = arith.constant 0 : index
    %1 = vector.load %arg2[%c0_1, %c0_2] : memref<16x128xbf16, #tpu.memory_space<vmem>>, vector<16x128xbf16>
    %cst = arith.constant dense<0.000000e+00> : vector<656x128xf32>
    %2 = tpu.matmul %0, %1, %cst {dimension_numbers = #tpu.dot_dimension_numbers<[1], [0], [0], [1], [0, 0, 1, 1], [], []>} : vector<656x16xbf16>, vector<16x128xbf16>, vector<656x128xf32> -> vector<656x128xf32>
    %c0_3 = arith.constant 0 : index
    %c0_4 = arith.constant 0 : index
    %3 = vector.load %arg3[%c0_3, %c0_4] : memref<1x128xf32, #tpu.memory_space<vmem>>, vector<1x128xf32>
    %4 = vector.broadcast %3 : vector<1x128xf32> to vector<656x128xf32>
    %5 = arith.addf %2, %4 : vector<656x128xf32>
    %6 = math.tanh %5 : vector<656x128xf32>
    %c0_5 = arith.constant 0 : index
    %c0_6 = arith.constant 0 : index
    %7 = vector.load %arg4[%c0_5, %c0_6] : memref<656x128xf32, #tpu.memory_space<vmem>>, vector<656x128xf32>
    tpu.vector_store %arg4[%c0_5, %c0_6], %6 {strides = array<i32>} : memref<656x128xf32, #tpu.memory_space<vmem>>, vector<656x128xf32>,
    return
  }
  func.func @transform_0(%arg0: i32) -> (i32, i32) {
    %c0_i32 = arith.constant 0 : i32
    %c0_i32_0 = arith.constant 0 : i32
    return %arg0, %c0_i32 : i32, i32
  }
  func.func @transform_1(%arg0: i32) -> (i32, i32) {
    %c0_i32 = arith.constant 0 : i32
    %c0_i32_0 = arith.constant 0 : i32
    %c0_i32_1 = arith.constant 0 : i32
    return %c0_i32, %c0_i32_0 : i32, i32
  }
  func.func @transform_2(%arg0: i32) -> (i32, i32) {
    %c0_i32 = arith.constant 0 : i32
    %c0_i32_0 = arith.constant 0 : i32
    %c0_i32_1 = arith.constant 0 : i32
    return %c0_i32, %c0_i32_0 : i32, i32
  }
  func.func @transform_3(%arg0: i32) -> (i32, i32) {
    %c0_i32 = arith.constant 0 : i32
    %c0_i32_0 = arith.constant 0 : i32
    return %arg0, %c0_i32 : i32, i32
  }
}

</mosaic_0001>

<llo_original>
// kernel: tile.23
$region0: #{tile.23}
  #allocation0 [shape = 's32[1]{0}', space=sflag, size = 0x4, scoped, tag = 'scoped memory for tile.23']
  %s0 = inlined_call_operand.vmem [shape: f32[64], index: 0, kind: input, shape index: {}]
  %s1 = inlined_call_operand.vmem [shape: f32[4,64], index: 1, kind: output, shape index: {}]
  // Predicated region
  $region2: #{tile.23} parent=0 // pred_check
    _
  $region3: #{tile.23} parent=0 // pred_check_branch
    %3 = sbr.rel (0) target = $region5
  $region4: #{tile.23} parent=0 // pred_region
    _
  $region5: #{tile.23} parent=0 // pred_fallthru
    _
  %v4 = vld [vmem:[%s0] ss:$0 sm:$0xff]
  %5 = vst [vmem:[%s1] sm:$0xf] %v4

// kernel: tile.24
$region0: #{tile.24}
  %s0 = inlined_call_operand.vmem [shape: f32[4,64], index: 0, kind: input, shape index: {}]
  %s1 = inlined_call_operand.vmem [shape: f32[1,256], index: 1, kind: output, shape index: {}]
  $region1: #{tile.24} parent=0
    #allocation0 [shape = 'u8[8192]{0}', space=vmem, size = 0x2000, scoped, tag = 'scoped mem for output reshape']
    #allocation1 [shape = 'u8[4096]{0}', space=vmem, size = 0x1000, scoped, tag = 'scoped mem for input reshape']
    %s3 = ssub.s32 16, 1
    %v4 = vld [vmem:[%s0] sm:%s3]
    %5 = vst [vmem:[#allocation1] sm:%s3] %v4
    %s6 = smov 3
    %v7 = vld [vmem:[#allocation1] ss:$2 sm:%s6]
    %vm8 = vcmask 523264
    %9 = vst.msk [vmem:[#allocation0] ss:$8 sm:$0x3] %vm8, %v7
    %s10 = scalar_lea.vmem [#allocation1], 1
    %s11 = smov 3
    %v12 = vld [vmem:[%s10] ss:$2 sm:%s11]
    %13 = vrot.lane.b32.xlu0 %v12, 64
    %v14 = vpop.permute.xlu0 %13
    %vm15 = vcmask 1048064
    %16 = vst.msk [vmem:[#allocation0] ss:$8 sm:$0x3] %vm15, %v14
    %s18 = ssub.s32 2, 1
    %v19 = vld [vmem:[#allocation0] sm:%s18]
    %s21 = ssub.s32 2, 1
    %22 = vst [vmem:[%s1] sm:%s21] %v19
    %s23 = scalar_lea.vmem [#allocation0], 8
    %v24 = vld [vmem:[%s23] sm:%s18]
    %s26 = ssub.s32 2, 1
    %s27 = scalar_lea.vmem %s1, 1
    %28 = vst [vmem:[%s27] sm:%s26] %v24

// kernel: tile.28
$region0: #{tile.28}
  #allocation0 [shape = 's32[1]{0}', space=sflag, size = 0x4, scoped, tag = 'scoped memory for tile.28']
  %s0 = inlined_call_operand.vmem [shape: f32[32], index: 0, kind: input, shape index: {}]
  %s1 = inlined_call_operand.vmem [shape: f32[4,32], index: 1, kind: output, shape index: {}]
  // Predicated region
  $region2: #{tile.28} parent=0 // pred_check
    _
  $region3: #{tile.28} parent=0 // pred_check_branch
    %3 = sbr.rel (0) target = $region5
  $region4: #{tile.28} parent=0 // pred_region
    _
  $region5: #{tile.28} parent=0 // pred_fallthru
    _
  %v4 = vld [vmem:[%s0] ss:$0 sm:$0xff]
  %5 = vst [vmem:[%s1] sm:$0xf] %v4

// kernel: tile.29
$region0: #{tile.29}
  %s0 = inlined_call_operand.vmem [shape: f32[4,32], index: 0, kind: input, shape index: {}]
  %s1 = inlined_call_operand.vmem [shape: f32[1,128], index: 1, kind: output, shape index: {}]
  $region1: #{tile.29} parent=0
    #allocation0 [shape = 'u8[4096]{0}', space=vmem, size = 0x1000, scoped, tag = 'scoped mem for output reshape']
    #allocation1 [shape = 'u8[4096]{0}', space=vmem, size = 0x1000, scoped, tag = 'scoped mem for input reshape']
    %s3 = ssub.s32 16, 1
    %v4 = vld [vmem:[%s0] sm:%s3]
    %5 = vst [vmem:[#allocation1] sm:%s3] %v4
    %v6 = vld [vmem:[#allocation1] sm:$0x1]
    %vm7 = vcmask 261120
    %8 = vst.msk [vmem:[#allocation0] sm:$0x1] %vm7, %v6
    %s9 = scalar_lea.vmem [#allocation1], 3
    %v10 = vld [vmem:[%s9] sm:$0x1]
    %11 = vrot.lane.b32.xlu0 %v10, 96
    %v12 = vpop.permute.xlu0 %11
    %vm13 = vcmask 1048320
    %14 = vst.msk [vmem:[#allocation0] sm:$0x1] %vm13, %v12
    %s15 = scalar_lea.vmem [#allocation1], 2
    %v16 = vld [vmem:[%s15] sm:$0x1]
    %17 = vrot.lane.b32.xlu0 %v16, 64
    %v18 = vpop.permute.xlu0 %17
    %vm19 = vcmask 785920
    %20 = vst.msk [vmem:[#allocation0] sm:$0x1] %vm19, %v18
    %s21 = scalar_lea.vmem [#allocation1], 1
    %v22 = vld [vmem:[%s21] sm:$0x1]
    %23 = vrot.lane.b32.xlu0 %v22, 32
    %v24 = vpop.permute.xlu0 %23
    %vm25 = vcmask 523520
    %26 = vst.msk [vmem:[#allocation0] sm:$0x1] %vm25, %v24
    %s28 = ssub.s32 2, 1
    %v29 = vld [vmem:[#allocation0] sm:%s28]
    %s31 = ssub.s32 2, 1
    %32 = vst [vmem:[%s1] sm:%s31] %v29

// kernel: tile.33
$region0: #{tile.33}
  #allocation0 [shape = 's32[1]{0}', space=sflag, size = 0x4, scoped, tag = 'scoped memory for tile.33']
  %s0 = inlined_call_operand.vmem [shape: f32[16], index: 0, kind: input, shape index: {}]
  %s1 = inlined_call_operand.vmem [shape: f32[16,16], index: 1, kind: output, shape index: {}]
  // Predicated region
  $region2: #{tile.33} parent=0 // pred_check
    _
  $region3: #{tile.33} parent=0 // pred_check_branch
    %3 = sbr.rel (0) target = $region5
  $region4: #{tile.33} parent=0 // pred_region
    _
  $region5: #{tile.33} parent=0 // pred_fallthru
    _
  %v4 = vld [vmem:[%s0] ss:$0 sm:$0xff]
  %5 = vst [vmem:[%s1] sm:$0xff] %v4
  %s6 = scalar_lea.vmem %s1, 8
  %7 = vst [vmem:[%s6] sm:$0xff] %v4

// kernel: tile.34
$region0: #{tile.34}
  %s0 = inlined_call_operand.vmem [shape: f32[16,16], index: 0, kind: input, shape index: {}]
  %s1 = inlined_call_operand.vmem [shape: f32[1,256], index: 1, kind: output, shape index: {}]
  $region1: #{tile.34} parent=0
    #allocation0 [shape = 'u8[8192]{0}', space=vmem, size = 0x2000, scoped, tag = 'scoped mem for output reshape']
    %s2 = smov 3
    %v3 = vld [vmem:[%s0] ss:$8 sm:%s2]
    %vm4 = vcmask 130048
    %5 = vst.msk [vmem:[#allocation0] ss:$8 sm:$0x3] %vm4, %v3
    %s6 = scalar_lea.vmem %s0, 7
    %s7 = smov 3
    %v8 = vld [vmem:[%s6] ss:$8 sm:%s7]
    %9 = vrot.lane.b32.xlu0 %v8, 112
    %v10 = vpop.permute.xlu0 %9
    %vm11 = vcmask 1048448
    %12 = vst.msk [vmem:[#allocation0] ss:$8 sm:$0x3] %vm11, %v10
    %s13 = scalar_lea.vmem %s0, 6
    %s14 = smov 3
    %v15 = vld [vmem:[%s13] ss:$8 sm:%s14]
    %16 = vrot.lane.b32.xlu0 %v15, 96
    %v17 = vpop.permute.xlu0 %16
    %vm18 = vcmask 917248
    %19 = vst.msk [vmem:[#allocation0] ss:$8 sm:$0x3] %vm18, %v17
    %s20 = scalar_lea.vmem %s0, 5
    %s21 = smov 3
    %v22 = vld [vmem:[%s20] ss:$8 sm:%s21]
    %23 = vrot.lane.b32.xlu0 %v22, 80
    %v24 = vpop.permute.xlu0 %23
    %vm25 = vcmask 786048
    %26 = vst.msk [vmem:[#allocation0] ss:$8 sm:$0x3] %vm25, %v24
    %s27 = scalar_lea.vmem %s0, 4
    %s28 = smov 3
    %v29 = vld [vmem:[%s27] ss:$8 sm:%s28]
    %30 = vrot.lane.b32.xlu0 %v29, 64
    %v31 = vpop.permute.xlu0 %30
    %vm32 = vcmask 654848
    %33 = vst.msk [vmem:[#allocation0] ss:$8 sm:$0x3] %vm32, %v31
    %s34 = scalar_lea.vmem %s0, 3
    %s35 = smov 3
    %v36 = vld [vmem:[%s34] ss:$8 sm:%s35]
    %37 = vrot.lane.b32.xlu0 %v36, 48
    %v38 = vpop.permute.xlu0 %37
    %vm39 = vcmask 523648
    %40 = vst.msk [vmem:[#allocation0] ss:$8 sm:$0x3] %vm39, %v38
    %s41 = scalar_lea.vmem %s0, 2
    %s42 = smov 3
    %v43 = vld [vmem:[%s41] ss:$8 sm:%s42]
    %44 = vrot.lane.b32.xlu0 %v43, 32
    %v45 = vpop.permute.xlu0 %44
    %vm46 = vcmask 392448
    %47 = vst.msk [vmem:[#allocation0] ss:$8 sm:$0x3] %vm46, %v45
    %s48 = scalar_lea.vmem %s0, 1
    %s49 = smov 3
    %v50 = vld [vmem:[%s48] ss:$8 sm:%s49]
    %51 = vrot.lane.b32.xlu0 %v50, 16
    %v52 = vpop.permute.xlu0 %51
    %vm53 = vcmask 261248
    %54 = vst.msk [vmem:[#allocation0] ss:$8 sm:$0x3] %vm53, %v52
    %s56 = ssub.s32 2, 1
    %v57 = vld [vmem:[#allocation0] sm:%s56]
    %s59 = ssub.s32 2, 1
    %60 = vst [vmem:[%s1] sm:%s59] %v57
    %s61 = scalar_lea.vmem [#allocation0], 8
    %v62 = vld [vmem:[%s61] sm:%s56]
    %s64 = ssub.s32 2, 1
    %s65 = scalar_lea.vmem %s1, 1
    %66 = vst [vmem:[%s65] sm:%s64] %v62

</llo_original>
